<compile_context>
chip_gen: v5e
topology: v5e:2x2
jax: 0.10.0
libtpu: 0.0.40
codegen_flags: <defaults>
</compile_context>

<pallas_src>
import functools
from math import log

import jax
import jax.numpy as jnp
import numpy as np
from jax.experimental import pallas as pl
from jax.experimental.pallas import tpu as pltpu

LANES = 128
SUBLANES = 8


# --------------------------------------------------------------------------
# pe buffer (module __init__) — plain JAX glue, identical to the PyTorch code
# --------------------------------------------------------------------------
def make_positional_encoding(d_model: int, max_len: int = 5000, dtype=jnp.float32):
    position = jnp.arange(max_len, dtype=jnp.float32)[:, None]            # (max_len, 1)
    div_term = jnp.exp(
        jnp.arange(0, d_model, 2, dtype=jnp.float32) * (-log(10000.0) / d_model)
    )                                                                     # (d_model//2,)
    pe = jnp.zeros((1, max_len, d_model), dtype=jnp.float32)
    pe = pe.at[0, :, 0::2].set(jnp.sin(position * div_term))
    pe = pe.at[0, :, 1::2].set(jnp.cos(position * div_term))
    return pe.astype(dtype)


# --------------------------------------------------------------------------
# Kernels (elementwise; compute in f32, cast at the store)
# --------------------------------------------------------------------------
def _add_pe_kernel(x_ref, pe_ref, o_ref):
    y = x_ref[...].astype(jnp.float32) + pe_ref[...].astype(jnp.float32)
    o_ref[...] = y.astype(o_ref.dtype)


def _add_pe_dropout_kernel(x_ref, pe_ref, u_ref, o_ref, *, p):
    y = x_ref[...].astype(jnp.float32) + pe_ref[...].astype(jnp.float32)
    keep = u_ref[...] >= jnp.float32(p)                     # drop with prob p
    scale = jnp.float32(1.0 / (1.0 - p))                    # inverted dropout
    o_ref[...] = jnp.where(keep, y * scale, jnp.float32(0.0)).astype(o_ref.dtype)


# --------------------------------------------------------------------------
# Launch helper: arrays are (B, R, C); pe is (1, R_pe, C) with R <= R_pe and
# row r of x aligned to row r of pe.
# --------------------------------------------------------------------------
def _row_tile(num_rows: int, row_bytes: int, target_bytes: int = 1 << 20) -> int:
    tr = max(1, target_bytes // max(1, row_bytes))
    tr = max(SUBLANES, (tr // SUBLANES) * SUBLANES)          # multiple of 8 sublanes
    r_ceil = ((num_rows + SUBLANES - 1) // SUBLANES) * SUBLANES
    return min(tr, r_ceil)


def _launch(x3, pe3, u3, p, apply_dropout):
    B, R, C = x3.shape
    tr = _row_tile(R, C * x3.dtype.itemsize)
    grid = (pl.cdiv(R, tr), B)                               # B innermost -> pe tile resident

    x_spec = pl.BlockSpec((1, tr, C), lambda r, b: (b, r, 0))
    pe_spec = pl.BlockSpec((1, tr, C), lambda r, b: (0, r, 0))   # independent of batch axis
    out_spec = pl.BlockSpec((1, tr, C), lambda r, b: (b, r, 0))

    if apply_dropout:
        kernel = functools.partial(_add_pe_dropout_kernel, p=float(p))
        in_specs = [x_spec, pe_spec, pl.BlockSpec((1, tr, C), lambda r, b: (b, r, 0))]
        args = (x3, pe3, u3)
    else:
        kernel = _add_pe_kernel
        in_specs = [x_spec, pe_spec]
        args = (x3, pe3)

    return pl.pallas_call(
        kernel,
        out_shape=jax.ShapeDtypeStruct((B, R, C), x3.dtype),
        grid=grid,
        in_specs=in_specs,
        out_specs=out_spec,
        compiler_params=pltpu.CompilerParams(
            dimension_semantics=("parallel", "parallel"),
            vmem_limit_bytes=48 * 1024 * 1024,               # headroom on v7x (64 MiB VMEM)
        ),
    )(*args)


# --------------------------------------------------------------------------
# Forward wrapper: x [B, S, D], pe [1, max_len, D]
# --------------------------------------------------------------------------
def positional_encoding_forward(x, pe, *, p=0.1, train=True, key=None):
    B, S, D = x.shape
    _, max_len, D_pe = pe.shape
    assert D == D_pe and S <= max_len

    apply_dropout = bool(train) and float(p) > 0.0
    if apply_dropout and float(p) >= 1.0:
        return jnp.zeros_like(x)                             # PyTorch p=1.0 semantics

    u = None
    if apply_dropout:
        if key is None:
            key = jax.random.PRNGKey(0)
        u = jax.random.uniform(key, (B, S, D), dtype=jnp.float32)

    # Lane-dense packing when the row-major (S, D) tail folds into 128 lanes.
    if (S * D) % LANES == 0 and (max_len * D) % LANES == 0:
        R = (S * D) // LANES
        x3 = x.reshape(B, R, LANES)
        pe3 = pe.reshape(1, (max_len * D) // LANES, LANES)   # free reshape of full buffer
        u3 = u.reshape(B, R, LANES) if u is not None else None
    else:
        x3, pe3, u3 = x, pe, u                               # (B, S, D) blocks over full pe

    out3 = _launch(x3, pe3, u3, p, apply_dropout)
    return out3.reshape(B, S, D)


# --------------------------------------------------------------------------
# Demo / self-test
# --------------------------------------------------------------------------
if __name__ == "__main__":
    B, S, D = 2, 8, 32            # batch=2, seq=8, d_model=32
    dropout_p = 0.1

    key = jax.random.PRNGKey(0)
    kx, kdrop = jax.random.split(key)
    x = jax.random.normal(kx, (B, S, D), dtype=jnp.float32)
    pe = make_positional_encoding(D, max_len=5000)

    ref = np.asarray(x) + np.asarray(pe[:, :S, :])

    # Eval mode (dropout = identity): must match x + pe.
    y_eval = jax.block_until_ready(
        positional_encoding_forward(x, pe, p=dropout_p, train=False)
    )
    np.testing.assert_allclose(np.asarray(y_eval), ref, rtol=1e-6, atol=1e-6)

    # Train mode: mask is reproducible from the key, so check exact values.
    y_train = jax.block_until_ready(
        positional_encoding_forward(x, pe, p=dropout_p, train=True, key=kdrop)
    )
    u = np.asarray(jax.random.uniform(kdrop, (B, S, D), dtype=jnp.float32))
    expected = np.where(u >= dropout_p, ref / (1.0 - dropout_p), 0.0)
    np.testing.assert_allclose(np.asarray(y_train), expected, rtol=1e-5, atol=1e-6)

    print("KERNEL_OK")
</pallas_src>

<mosaic_0001>
module attributes {stable_mosaic.version = 11 : i64} {
  func.func @_add_pe_kernel(%arg0: i32, %arg1: i32, %arg2: memref<1x8x128xf32, #tpu.memory_space<vmem>>, %arg3: memref<1x8x128xf32, #tpu.memory_space<vmem>>, %arg4: memref<1x8x128xf32, #tpu.memory_space<vmem>>) attributes {dimension_semantics = [#tpu.dimension_semantics<parallel>, #tpu.dimension_semantics<parallel>], iteration_bounds = array<i64: 1, 2>, scalar_prefetch = 0 : i64, scratch_operands = 0 : i64, tpu.core_type = #tpu.core_type<tc>, window_params = [{transform_indices = @transform_0, window_bounds = array<i64: 1, 8, 128>}, {transform_indices = @transform_1, window_bounds = array<i64: 1, 8, 128>}, {transform_indices = @transform_2, window_bounds = array<i64: 1, 8, 128>}]} {
    %c0 = arith.constant 0 : index
    %c0_0 = arith.constant 0 : index
    %c0_1 = arith.constant 0 : index
    %0 = vector.load %arg2[%c0, %c0_0, %c0_1] : memref<1x8x128xf32, #tpu.memory_space<vmem>>, vector<1x8x128xf32>
    %c0_2 = arith.constant 0 : index
    %c0_3 = arith.constant 0 : index
    %c0_4 = arith.constant 0 : index
    %1 = vector.load %arg3[%c0_2, %c0_3, %c0_4] : memref<1x8x128xf32, #tpu.memory_space<vmem>>, vector<1x8x128xf32>
    %2 = arith.addf %0, %1 : vector<1x8x128xf32>
    %c0_5 = arith.constant 0 : index
    %c0_6 = arith.constant 0 : index
    %c0_7 = arith.constant 0 : index
    %3 = vector.load %arg4[%c0_5, %c0_6, %c0_7] : memref<1x8x128xf32, #tpu.memory_space<vmem>>, vector<1x8x128xf32>
    tpu.vector_store %arg4[%c0_5, %c0_6, %c0_7], %2 {strides = array<i32>} : memref<1x8x128xf32, #tpu.memory_space<vmem>>, vector<1x8x128xf32>,
    return
  }
  func.func @transform_0(%arg0: i32, %arg1: i32) -> (i32, i32, i32) {
    %c0_i32 = arith.constant 0 : i32
    %c0_i32_0 = arith.constant 0 : i32
    return %arg1, %arg0, %c0_i32 : i32, i32, i32
  }
  func.func @transform_1(%arg0: i32, %arg1: i32) -> (i32, i32, i32) {
    %c0_i32 = arith.constant 0 : i32
    %c0_i32_0 = arith.constant 0 : i32
    %c0_i32_1 = arith.constant 0 : i32
    return %c0_i32, %arg0, %c0_i32_0 : i32, i32, i32
  }
  func.func @transform_2(%arg0: i32, %arg1: i32) -> (i32, i32, i32) {
    %c0_i32 = arith.constant 0 : i32
    %c0_i32_0 = arith.constant 0 : i32
    return %arg1, %arg0, %c0_i32 : i32, i32, i32
  }
}

</mosaic_0001>

<llo_original>
// kernel: tpu_custom_call.1
$region0: #{tpu_custom_call.1}
  #allocation0 [shape = 'u32[]', space=smem, size = 0x4, offset = 0x4, fixed_abs, tag = 'smem constant byte address 0x4 - core index']
  #allocation1 [shape = 'u32[72,128]{1,0:T(1,128)}', space=vmem, size = 0x9000, scoped, tag = 'internal scratch']
  %s0 = inlined_call_operand.vmem [shape: f32[2,2,128], index: 0, kind: input, shape index: {}]
  %s1 = inlined_call_operand.vmem [shape: f32[1,1250,128], index: 1, kind: input, shape index: {}]
  %s2 = inlined_call_operand.hbm [shape: f32[2,2,128], index: 2, kind: output, shape index: {}]
  %s3 = sld [smem:[#allocation0]]
  $region41: #{tpu_custom_call.1} parent=0
    _
  %s5 = ssub.s32 1, %s3
  %s6 = scalar_select 0, %s5, %s3
  $region1: #{tpu_custom_call.1} parent=0
    #allocation2 [shape = 'u8[8192]{0}', space=vmem, size = 0x2000, scoped, tag = 'output window, operand 0']
    #allocation3 [shape = 's32[2]{0}', space=sflag, size = 0x8, scoped, tag = 'scoped memory for tpu_custom_call.1']
    %7 = vsyncpa [#allocation3], 0
    %s8 = scalar_lea.sflag [#allocation3], 1
    %9 = vsyncpa %s8, 0
    loop: start=0, step=1, limit=4
    $region2: #{tpu_custom_call.1} parent=1 // loop_pre_header
      _
    $region3: #{tpu_custom_call.1} parent=1 // loop_header
      %s11 = sphi 0, %s15
      %p12 = scmp.ge.s32.totalorder %s11, 4
      %s18 = sphi 0, %s30
      %s19 = sphi 0, %s26
      %s20 = sphi 0, %s18
      %s21 = sphi 0, %s19
      %s22 = sphi 0, %s20
      %s23 = sphi 0, %s21
      %s35 = sphi 0, %s37
      %s38 = sphi 0, %s35
      %s39 = sphi 0, %s38
      %s55 = sphi 0, %s39
      %s61 = sphi 0, %s63
      %s64 = sphi 0, %s61
      %s65 = sphi 0, %s64
      %s81 = sphi 0, %s65
      %s89 = sphi 0, %s91
      %s92 = sphi 0, %s89
      %s93 = sphi 0, %s92
      %s109 = sphi 0, %s93
    $region4: #{tpu_custom_call.1} parent=1 // loop_header_branch
      %14 = sbr.rel (%p12) target = $region8
    $region5: #{tpu_custom_call.1} parent=1 // loop_body
      %s16 = ssub.s32 %s11, 1
      %s17 = ssub.s32 %s11, 2
      %s24 = sadd.s32 1, %s19
      %p25 = scmp.ge.s32.totalorder %s24, 2
      %s26 = scalar_select %p25, 0, %s24
      %s27 = sadd.s32 1, %s18
      %s28 = scalar_select %p25, %s27, %s18
      %p29 = scmp.ge.s32.totalorder %s28, 1
      %s30 = scalar_select %p29, 0, %s28
      %s31 = ssub.s32 %s19, %s26
      %s32 = ssub.s32 %s18, %s30
      %s33 = sor.u32 %s31, %s32
      %p34 = scmp.eq.s32.totalorder %s33, 0
      %s36 = sadd.s32 %s35, 1
      %s37 = scalar_select %p34, %s35, %s36
      %p40 = pneg %p34
      %p41 = scmp.eq.s32.totalorder %s11, 1
      %p42 = por %p40, %p41
      %p43 = scmp.ne.s32.totalorder %s35, %s38
      %p44 = scmp.eq.s32.totalorder %s11, 0
      %p45 = por %p43, %p44
      %p46 = scmp.ne.s32.totalorder %s35, %s38
      %p47 = scmp.eq.s32.totalorder %s16, 1
      %p48 = por %p46, %p47
      %p49 = scmp.ne.s32.totalorder %s38, %s39
      %p50 = scmp.eq.s32.totalorder %s16, 0
      %p51 = por %p49, %p50
      %p52 = scmp.ne.s32.totalorder %s38, %s39
      %p53 = scmp.eq.s32.totalorder %s17, 1
      %p54 = por %p52, %p53
      %p56 = scmp.ne.s32.totalorder %s39, %s55
      %p57 = scmp.eq.s32.totalorder %s17, 0
      %p58 = por %p56, %p57
      %s59 = ssub.s32 %s18, %s30
      %p60 = scmp.eq.s32.totalorder %s59, 0
      %s62 = sadd.s32 %s61, 1
      %s63 = scalar_select %p60, %s61, %s62
      %p66 = pneg %p60
      %p67 = scmp.eq.s32.totalorder %s11, 1
      %p68 = por %p66, %p67
      %p69 = scmp.ne.s32.totalorder %s61, %s64
      %p70 = scmp.eq.s32.totalorder %s11, 0
      %p71 = por %p69, %p70
      %p72 = scmp.ne.s32.totalorder %s61, %s64
      %p73 = scmp.eq.s32.totalorder %s16, 1
      %p74 = por %p72, %p73
      %p75 = scmp.ne.s32.totalorder %s64, %s65
      %p76 = scmp.eq.s32.totalorder %s16, 0
      %p77 = por %p75, %p76
      %p78 = scmp.ne.s32.totalorder %s64, %s65
      %p79 = scmp.eq.s32.totalorder %s17, 1
      %p80 = por %p78, %p79
      %p82 = scmp.ne.s32.totalorder %s65, %s81
      %p83 = scmp.eq.s32.totalorder %s17, 0
      %p84 = por %p82, %p83
      %s85 = ssub.s32 %s19, %s26
      %s86 = ssub.s32 %s18, %s30
      %s87 = sor.u32 %s85, %s86
      %p88 = scmp.eq.s32.totalorder %s87, 0
      %s90 = sadd.s32 %s89, 1
      %s91 = scalar_select %p88, %s89, %s90
      %p94 = pneg %p88
      %p95 = scmp.eq.s32.totalorder %s11, 1
      %p96 = por %p94, %p95
      %p97 = scmp.ne.s32.totalorder %s89, %s92
      %p98 = scmp.eq.s32.totalorder %s11, 0
      %p99 = por %p97, %p98
      %p100 = scmp.ne.s32.totalorder %s89, %s92
      %p101 = scmp.eq.s32.totalorder %s16, 1
      %p102 = por %p100, %p101
      %p103 = scmp.ne.s32.totalorder %s92, %s93
      %p104 = scmp.eq.s32.totalorder %s16, 0
      %p105 = por %p103, %p104
      %p106 = scmp.ne.s32.totalorder %s92, %s93
      %p107 = scmp.eq.s32.totalorder %s17, 1
      %p108 = por %p106, %p107
      %p110 = scmp.ne.s32.totalorder %s93, %s109
      %p111 = scmp.eq.s32.totalorder %s17, 0
      %p112 = por %p110, %p111
      %p113 = scmp.le.s32.totalorder 1, %s11
      %p114 = scmp.lt.s32.totalorder %s11, 3
      %p115 = pnand %p113, %p114
      %p116 = pneg %p115
      // Predicated region
      $region9: #{tpu_custom_call.1} parent=5 // pred_check
        _
      $region10: #{tpu_custom_call.1} parent=5 // pred_check_branch
        %118 = sbr.rel (%p115) target = $region12
      $region11: #{tpu_custom_call.1} parent=5 // pred_region
        %s119 = ssub.s32 %s11, 1
        // Predicated region
        $region13: #{tpu_custom_call.1} parent=11 // pred_check
          %p120 = pneg %p77
        $region14: #{tpu_custom_call.1} parent=11 // pred_check_branch
          %122 = sbr.rel (%p120) target = $region16
        $region15: #{tpu_custom_call.1} parent=11 // pred_region
          %p123 = scmp.lt.s32.totalorder %s20, 156
          %s124 = scalar_select %p123, %s20, 156
          %s125 = smul.addr %s124, 8
          %s126 = scalar_lea.vmem %s1, %s125
        $region16: #{tpu_custom_call.1} parent=11 // pred_fallthru
          _
      $region12: #{tpu_custom_call.1} parent=5 // pred_fallthru
        _
      %p127 = scmp.lt.s32.totalorder %s11, 2
      // Predicated region
      $region17: #{tpu_custom_call.1} parent=5 // pred_check
        %p128 = pneg %p127
      $region18: #{tpu_custom_call.1} parent=5 // pred_check_branch
        %130 = sbr.rel (%p128) target = $region20
      $region19: #{tpu_custom_call.1} parent=5 // pred_region
        // Predicated region
        $region21: #{tpu_custom_call.1} parent=19 // pred_check
          %p131 = pneg %p45
        $region22: #{tpu_custom_call.1} parent=19 // pred_check_branch
          %133 = sbr.rel (%p131) target = $region24
        $region23: #{tpu_custom_call.1} parent=19 // pred_region
          %s134 = smul.u32 4, %s18
          %s135 = ssub.s32 1, %s134
          %s136 = smul.u32 2, %s135
          %p137 = scmp.lt.s32.totalorder %s19, 1
          %s138 = scalar_select %p137, %s19, 1
          %p139 = scmp.lt.s32.totalorder %s134, 0
          %s140 = scalar_select %p139, %s134, 0
          %s141 = sadd.s32 %s140, %s138
          %s142 = smul.addr %s141, 2
          %s143 = scalar_lea.vmem %s0, %s142
          %s144 = smul.u32 4, %s18
          %s145 = ssub.s32 1, %s144
          %s146 = smul.u32 2, %s145
        $region24: #{tpu_custom_call.1} parent=19 // pred_fallthru
          _
      $region20: #{tpu_custom_call.1} parent=5 // pred_fallthru
        _
      %p147 = scmp.le.s32.totalorder 1, %s11
      %p148 = scmp.lt.s32.totalorder %s11, 3
      %p149 = pnand %p147, %p148
      %p150 = pneg %p149
      // Predicated region
      $region25: #{tpu_custom_call.1} parent=5 // pred_check
        _
      $region26: #{tpu_custom_call.1} parent=5 // pred_check_branch
        %152 = sbr.rel (%p149) target = $region28
      $region27: #{tpu_custom_call.1} parent=5 // pred_region
        %s153 = ssub.s32 %s11, 1
        %s154 = smul.u32 4, %s20
        %s155 = ssub.s32 1, %s154
        %s156 = smul.u32 2, %s155
        %p157 = scmp.lt.s32.totalorder %s21, 1
        %s158 = scalar_select %p157, %s21, 1
        %p159 = scmp.lt.s32.totalorder %s154, 0
        %s160 = scalar_select %p159, %s154, 0
        %s161 = sadd.s32 %s160, %s158
        %s162 = smul.addr %s161, 2
        %s163 = scalar_lea.vmem %s0, %s162
        %p164 = pneg %p51
        %p165 = pneg %p48
        %p166 = scmp.lt.s32.totalorder %s20, 156
        %s167 = scalar_select %p166, %s20, 156
        %s168 = smul.addr %s167, 8
        %s169 = scalar_lea.vmem %s1, %s168
        %p170 = pneg %p77
        %p171 = pneg %p74
        %p172 = pneg %p105
        %p173 = pneg %p102
        %s174 = sand.u32 %s92, 1
        %s175 = scalar_lea.sflag [#allocation3], %s174
        %s176 = sand.u32 %s92, 1
        %s177 = smul.addr %s176, 8
        %s178 = scalar_lea.vmem [#allocation2], %s177
        %s179 = smul.u32 4, %s20
        %s180 = ssub.s32 1, %s179
        %s181 = smul.u32 2, %s180
        %p182 = scmp.lt.s32.totalorder %s21, 1
        %s183 = scalar_select %p182, %s21, 1
        %p184 = scmp.lt.s32.totalorder %s179, 0
        %s185 = scalar_select %p184, %s179, 0
        %s186 = sadd.s32 %s185, %s183
        %s187 = smul.addr %s186, 2
        %s188 = scalar_lea.vmem %s0, %s187
        %s189 = smul.u32 4, %s20
        %s190 = ssub.s32 1, %s189
        %s191 = smul.u32 2, %s190
        %p192 = scmp.lt.s32.totalorder %s20, 156
        %s193 = scalar_select %p192, %s20, 156
        %s194 = smul.addr %s193, 8
        %s195 = scalar_lea.vmem %s1, %s194
        %s196 = smul.u32 4, %s20
        %s197 = ssub.s32 1, %s196
        %s198 = smul.u32 2, %s197
        %v199 = vld [vmem:[%s188] sm:$0xff]
        %v200 = vld [vmem:[%s195] sm:$0xff]
        %v201 = vadd.f32 %v199, %v200
        %202 = vst [vmem:[%s178] sm:$0xff] %v201
        %s203 = sand.u32 %s92, 1
        %s204 = scalar_lea.sflag [#allocation3], %s203
        %s205 = sand.u32 %s92, 1
        %s206 = smul.addr %s205, 8
        %s207 = scalar_lea.vmem [#allocation2], %s206
        // Predicated region
        $region29: #{tpu_custom_call.1} parent=27 // pred_check
          %p208 = pneg %p102
        $region30: #{tpu_custom_call.1} parent=27 // pred_check_branch
          %210 = sbr.rel (%p208) target = $region32
        $region31: #{tpu_custom_call.1} parent=27 // pred_region
          %s211 = smul.u32 4, %s20
          %s212 = ssub.s32 1, %s211
          %s213 = smul.u32 2, %s212
          %s214 = ssub.s32 8, %s213
          %s215 = sshll.u32 %s214, 4
          %216 = vsyncadd %s204, %s215
          %p217 = scmp.ne.s32.totalorder 0, %s213
          %s218 = sadd.s32 %s211, %s21
          %s219 = smul.addr %s218, 2
          %s220 = scalar_lea.hbm %s2, %s219
          %s221 = smul.u32 2, %s212
          %s222 = sshll.u32 %s207, 4
          %s223 = int_to_ptr.vmem [resolvable:$true] %s222
          %s224 = sshll.u32 %s220, 4
          %s225 = int_to_ptr.hbm [resolvable:$true] %s224
          %s226 = sshll.u32 %s221, 4
          %230 = dma.vmem_to_hbm [thread:$0]  (%p217), %s223, %s226, %s225, %s204, 32, 32, 2
        $region32: #{tpu_custom_call.1} parent=27 // pred_fallthru
          _
      $region28: #{tpu_custom_call.1} parent=5 // pred_fallthru
        _
      %p231 = scmp.le.s32.totalorder 2, %s11
      // Predicated region
      $region33: #{tpu_custom_call.1} parent=5 // pred_check
        %p232 = pneg %p231
      $region34: #{tpu_custom_call.1} parent=5 // pred_check_branch
        %234 = sbr.rel (%p232) target = $region36
      $region35: #{tpu_custom_call.1} parent=5 // pred_region
        %s235 = ssub.s32 %s11, 2
        // Predicated region
        $region37: #{tpu_custom_call.1} parent=35 // pred_check
          %p236 = pneg %p108
        $region38: #{tpu_custom_call.1} parent=35 // pred_check_branch
          %238 = sbr.rel (%p236) target = $region40
        $region39: #{tpu_custom_call.1} parent=35 // pred_region
          %s239 = sand.u32 %s93, 1
          %s240 = scalar_lea.sflag [#allocation3], %s239
          %s241 = sand.u32 %s93, 1
          %s242 = smul.addr %s241, 8
          %s243 = scalar_lea.vmem [#allocation2], %s242
          %245 = dma.done %s240, 128
        $region40: #{tpu_custom_call.1} parent=35 // pred_fallthru
          _
      $region36: #{tpu_custom_call.1} parent=5 // pred_fallthru
        _
    $region6: #{tpu_custom_call.1} parent=1 // loop_footer
      %s15 = sadd.s32 1, %s11
    $region7: #{tpu_custom_call.1} parent=1 // loop_footer_branch
      %10 = sbr.rel target = $region3
    $region8: #{tpu_custom_call.1} parent=1 // loop_exit
      _
    %246 = vsyncpa [#allocation3], 1
    %s247 = scalar_lea.sflag [#allocation3], 1
    %248 = vsyncpa %s247, 1

</llo_original>
